<compile_context>
chip_gen: v7x
topology: tpu7x:2x2x1
jax: 0.10.0
libtpu: 0.0.40
codegen_flags: <defaults>
</compile_context>

<pallas_src>
import functools

import jax
import jax.numpy as jnp
from jax.experimental import pallas as pl
from jax.experimental.pallas import tpu as pltpu

_NSEM = 16            # row-DMA ring depth (in-flight HBM row fetches per tile)
_UNROLL = 8           # rows issued/retired per loop iteration (tile rows are a multiple of 8)
_VMEM_LIMIT = 32 * 1024 * 1024   # explicit scoped-VMEM limit, safe on v5e/v6e/v7x


def _round_up(x, m):
    return (x + m - 1) // m * m


# --------------------------------------------------------------------------------------
# Gather back-ends
# --------------------------------------------------------------------------------------
def _gather_rows_vmem(ids_ref, table_ref, dst_ref, *, base):
    """dst_ref[t, :] = table_ref[ids[base + t], :] via VMEM dynamic-slice copies."""
    tn = dst_ref.shape[0]

    @pl.loop(0, tn // _UNROLL)
    def _(blk):
        t0 = pl.multiple_of(blk * _UNROLL, _UNROLL)
        for u in range(_UNROLL):                       # static unroll: 8 rows per iteration
            t = t0 + u
            row = ids_ref[base + t]
            dst_ref[pl.ds(t, 1), :] = table_ref[pl.ds(row, 1), :]


def _gather_rows_hbm(ids_ref, table_hbm, dst_ref, sem, *, base, n_valid, nsem):
    """dst_ref[t, :] = table_hbm[ids[base + t], :] via a ring of async row DMAs.

    Rows past `n_valid` (padding in the last tile) issue no DMAs at all.
    """
    tn = dst_ref.shape[0]

    def row_copy(t, row):
        # Start and wait descriptors are built identically (same row slice) so the
        # transfer shapes can never diverge.
        return pltpu.make_async_copy(
            table_hbm.at[pl.ds(row, 1)], dst_ref.at[pl.ds(t, 1)], sem.at[t % nsem])

    # Prime the ring.
    @pl.loop(0, min(nsem, tn))
    def _(t):
        @pl.when(base + t < n_valid)
        def _():
            row_copy(t, ids_ref[base + t]).start()

    # Retire rows in order and keep the ring full.  Unrolled so several DMA descriptors
    # are issued per loop iteration (descriptor issue, not bandwidth, is the bottleneck).
    @pl.loop(0, tn // _UNROLL)
    def _(blk):
        t0 = pl.multiple_of(blk * _UNROLL, _UNROLL)
        for u in range(_UNROLL):
            t = t0 + u
            t_next = t + nsem
            # Hoist all SMEM id reads above the wait (.wait() breaks sst->sld forwarding).
            row_t = ids_ref[base + t]
            issue_next = jnp.logical_and(t_next < tn, base + t_next < n_valid)
            row_next = ids_ref[jnp.where(issue_next, base + t_next, 0)]

            @pl.when(base + t < n_valid)
            def _():
                row_copy(t, row_t).wait()

            @pl.when(issue_next)
            def _():
                row_copy(t_next, row_next).start()


# --------------------------------------------------------------------------------------
# Kernel bodies
# --------------------------------------------------------------------------------------
def _gather_kernel(ids_ref, table_ref, out_ref, *scratch, n_valid, vmem_table, nsem):
    """Pure row gather: out[t] = table[ids[base + t]] (projection folded or absent)."""
    base = pl.program_id(0) * out_ref.shape[0]
    if vmem_table:
        _gather_rows_vmem(ids_ref, table_ref, out_ref, base=base)
    else:
        # Rows are DMA'd straight into the pipelined output tile (no landing buffer).
        _gather_rows_hbm(ids_ref, table_ref, out_ref, scratch[0],
                         base=base, n_valid=n_valid, nsem=nsem)


def _gather_project_kernel(ids_ref, table_ref, w_ref, b_ref, out_ref, rows_ref, *scratch,
                           n_valid, vmem_table, nsem):
    """Fused gather + linear projection: out[t] = table[ids[base + t]] @ W + b."""
    base = pl.program_id(0) * out_ref.shape[0]
    if vmem_table:
        _gather_rows_vmem(ids_ref, table_ref, rows_ref, base=base)
    else:
        _gather_rows_hbm(ids_ref, table_ref, rows_ref, scratch[0],
                         base=base, n_valid=n_valid, nsem=nsem)
    acc = jnp.dot(rows_ref[...], w_ref[...], preferred_element_type=jnp.float32)
    out_ref[...] = (acc + b_ref[...].astype(jnp.float32)).astype(out_ref.dtype)


# --------------------------------------------------------------------------------------
# Wrapper
# --------------------------------------------------------------------------------------
@functools.partial(jax.jit, static_argnames=("token_tile", "vmem_table_budget_bytes"))
def token_embedding_forward(tokens, table, w=None, b=None, *,
                            token_tile=1024,
                            vmem_table_budget_bytes=6 * 1024 * 1024):
    """Pallas TokenEmbedding forward.

    tokens: int32 [batch, num_tokens]
    table:  [num_embeddings, embedding_dim]                (nn.Embedding.weight)
    w:      optional [embedding_dim, output_dim]           (nn.Linear.weight.T)
    b:      optional [output_dim]
    returns [batch, num_tokens, output_dim or embedding_dim] in the table/weight dtype.
    """
    batch, num_tokens = tokens.shape
    n = batch * num_tokens
    v, d = table.shape

    project = w is not None
    out_dim = w.shape[1] if project else d
    o_pad = _round_up(out_dim, 128)

    if project:
        bias = b if b is not None else jnp.zeros((out_dim,), w.dtype)
        b_p = jnp.pad(bias, (0, o_pad - out_dim)).reshape(1, o_pad)

    # Fold the Linear into the table only when amortized (fold FLOPs V*d*O vs n*d*O).
    fold = project and (n >= v)
    if fold:
        # Pad W/b *before* the fold so the big folded table is already lane-dense.
        w_fold = jnp.pad(w, ((0, 0), (0, o_pad - out_dim)))
        table_eff = jnp.dot(table, w_fold) + b_p          # (V, o_pad)
        project_in_kernel = False
    else:
        table_eff = table
        project_in_kernel = project

    # Lane-dense table columns (no-op when already a multiple of 128 / when folded).
    c = table_eff.shape[1]
    c_pad = _round_up(c, 128)
    if c_pad != c:
        table_eff = jnp.pad(table_eff, ((0, 0), (0, c_pad - c)))

    if project_in_kernel:
        out_dtype = jnp.result_type(table.dtype, w.dtype)
        w_p = jnp.pad(w, ((0, c_pad - d), (0, o_pad - out_dim)))   # zero pad: result unchanged
    else:
        out_dtype = table_eff.dtype

    t_isize = table_eff.dtype.itemsize
    o_isize = jnp.dtype(out_dtype).itemsize

    # VMEM-resident fast path when the (padded) table fits the budget.
    table_bytes = v * c_pad * t_isize
    table_in_vmem = table_bytes <= vmem_table_budget_bytes

    # Tile-size selection from the VMEM budget (count double-buffering conservatively).
    resident_bytes = 2 * table_bytes if table_in_vmem else 0
    if project_in_kernel:
        resident_bytes += 2 * (c_pad * o_pad + o_pad) * jnp.dtype(w.dtype).itemsize
    per_token_bytes = 2 * o_pad * o_isize                      # double-buffered output tile
    if project_in_kernel:
        per_token_bytes += c_pad * t_isize                     # gather landing scratch
    tile_budget = max(_VMEM_LIMIT - resident_bytes - (4 << 20), per_token_bytes * 8)
    tn = min(_round_up(token_tile, 8),
             max(8, (tile_budget // per_token_bytes) // 8 * 8),
             _round_up(n, 8))
    if n > 8:
        # Keep at least two tiles so v7x's two TensorCores both get work.
        tn = min(tn, max(8, _round_up((n + 1) // 2, 8)))
    n_pad = _round_up(n, tn)

    # Flat, clamped, padded id vector (scalar-prefetched into SMEM).
    # NOTE: PyTorch raises on out-of-range ids; we clamp so a bad id can never drive an
    # out-of-bounds HBM DMA.
    ids = jnp.clip(tokens.reshape(-1).astype(jnp.int32), 0, v - 1)
    ids = jnp.pad(ids, (0, n_pad - n))

    if table_in_vmem:
        table_spec = pl.BlockSpec((v, c_pad), lambda i, ids_sref: (0, 0))  # resident
    else:
        table_spec = pl.BlockSpec(memory_space=pl.ANY)                     # stays in HBM
    out_spec = pl.BlockSpec((tn, o_pad), lambda i, ids_sref: (i, 0))
    dma_scratch = [] if table_in_vmem else [pltpu.SemaphoreType.DMA((_NSEM,))]

    if project_in_kernel:
        kernel = functools.partial(_gather_project_kernel, n_valid=n,
                                   vmem_table=table_in_vmem, nsem=_NSEM)
        in_specs = [table_spec,
                    pl.BlockSpec((c_pad, o_pad), lambda i, ids_sref: (0, 0)),
                    pl.BlockSpec((1, o_pad), lambda i, ids_sref: (0, 0))]
        scratch = [pltpu.VMEM((tn, c_pad), table_eff.dtype)] + dma_scratch
        operands = (ids, table_eff, w_p, b_p)
    else:
        kernel = functools.partial(_gather_kernel, n_valid=n,
                                   vmem_table=table_in_vmem, nsem=_NSEM)
        in_specs = [table_spec]
        scratch = dma_scratch
        operands = (ids, table_eff)

    out = pl.pallas_call(
        kernel,
        out_shape=jax.ShapeDtypeStruct((n_pad, o_pad), out_dtype),
        grid_spec=pltpu.PrefetchScalarGridSpec(
            num_scalar_prefetch=1,
            grid=(n_pad // tn,),
            in_specs=in_specs,
            out_specs=out_spec,
            scratch_shapes=scratch,
        ),
        compiler_params=pltpu.CompilerParams(
            dimension_semantics=("parallel",),
            vmem_limit_bytes=_VMEM_LIMIT,
        ),
    )(*operands)

    return out[:n, :out_dim].reshape(batch, num_tokens, out_dim)


# --------------------------------------------------------------------------------------
# Demo / self-test
# --------------------------------------------------------------------------------------
if __name__ == "__main__":
    num_embeddings = 64     # vocabulary size
    embedding_dim = 32
    output_dim = 16         # projection enabled
    batch, num_tokens = 2, 8

    key = jax.random.PRNGKey(0)
    k_tok, k_emb, k_w, k_b = jax.random.split(key, 4)

    # Deterministic params mirroring PyTorch defaults:
    #   nn.Embedding.weight ~ N(0, 1); nn.Linear ~ U(-1/sqrt(in), 1/sqrt(in)).
    table = jax.random.normal(k_emb, (num_embeddings, embedding_dim), jnp.float32)
    bound = 1.0 / (embedding_dim ** 0.5)
    w = jax.random.uniform(k_w, (embedding_dim, output_dim), jnp.float32, -bound, bound)
    b = jax.random.uniform(k_b, (output_dim,), jnp.float32, -bound, bound)
    tokens = jax.random.randint(k_tok, (batch, num_tokens), 0, num_embeddings, jnp.int32)

    ref_proj = jnp.take(table, tokens, axis=0) @ w + b
    ref_gather = jnp.take(table, tokens, axis=0)

    # 1) projection, VMEM-resident table, fused in-kernel MXU matmul (n < V -> no fold).
    out1 = jax.block_until_ready(token_embedding_forward(tokens, table, w, b))
    assert out1.shape == (batch, num_tokens, output_dim)
    assert jnp.allclose(out1, ref_proj, atol=2e-2), "proj/VMEM path mismatch"

    # 2) no projection, VMEM-resident table (exact row gather).
    out2 = jax.block_until_ready(token_embedding_forward(tokens, table))
    assert out2.shape == (batch, num_tokens, embedding_dim)
    assert jnp.allclose(out2, ref_gather, atol=1e-6), "gather/VMEM path mismatch"

    # 3) projection with the table forced onto the HBM row-DMA path.
    out3 = jax.block_until_ready(
        token_embedding_forward(tokens, table, w, b, vmem_table_budget_bytes=0))
    assert jnp.allclose(out3, ref_proj, atol=2e-2), "proj/HBM path mismatch"

    # 4) no projection, HBM row-DMA path (rows land directly in the output tile).
    out4 = jax.block_until_ready(
        token_embedding_forward(tokens, table, vmem_table_budget_bytes=0))
    assert jnp.allclose(out4, ref_gather, atol=1e-6), "gather/HBM path mismatch"

    # 5) folded-projection path (n >= V amortizes the one-time fold).
    tokens_long = jax.random.randint(k_tok, (batch, 64), 0, num_embeddings, jnp.int32)
    out5 = jax.block_until_ready(token_embedding_forward(tokens_long, table, w, b))
    ref5 = jnp.take(table, tokens_long, axis=0) @ w + b
    assert out5.shape == (batch, 64, output_dim)
    assert jnp.allclose(out5, ref5, atol=2e-2), "folded-projection path mismatch"

    print("KERNEL_OK")
</pallas_src>

<mosaic_0001>
module attributes {stable_mosaic.version = 11 : i64} {
  func.func @_gather_project_kernel(%arg0: i32, %arg1: memref<16xi32, #tpu.memory_space<smem>>, %arg2: memref<64x128xf32, #tpu.memory_space<vmem>>, %arg3: memref<128x128xf32, #tpu.memory_space<vmem>>, %arg4: memref<1x128xf32, #tpu.memory_space<vmem>>, %arg5: memref<8x128xf32, #tpu.memory_space<vmem>>, %arg6: memref<8x128xf32, #tpu.memory_space<vmem>>) attributes {dimension_semantics = [#tpu.dimension_semantics<parallel>], iteration_bounds = array<i64: 2>, scalar_prefetch = 1 : i64, scratch_operands = 1 : i64, tpu.core_type = #tpu.core_type<tc>, window_params = [{pipeline_mode = #tpu.pipeline_mode<synchronous>, transform_indices = @transform_0, window_bounds = array<i64: 64, 128>}, {pipeline_mode = #tpu.pipeline_mode<synchronous>, transform_indices = @transform_1, window_bounds = array<i64: 128, 128>}, {pipeline_mode = #tpu.pipeline_mode<synchronous>, transform_indices = @transform_2, window_bounds = array<i64: 1, 128>}, {transform_indices = @transform_3, window_bounds = array<i64: 8, 128>}]} {
    %c8_i32 = arith.constant 8 : i32
    %0 = arith.muli %arg0, %c8_i32 : i32
    %c0_i32 = arith.constant 0 : i32
    %c1_i32 = arith.constant 1 : i32
    %1 = arith.muli %c0_i32, %c1_i32 : i32
    %c0_i32_0 = arith.constant 0 : i32
    %2 = arith.addi %c0_i32_0, %1 : i32
    %c8_i32_1 = arith.constant 8 : i32
    %3 = arith.muli %2, %c8_i32_1 : i32
    %4 = tpu.assume_multiple %3, 8 : i32
    %c0_i32_2 = arith.constant 0 : i32
    %5 = arith.addi %4, %c0_i32_2 : i32
    %6 = arith.addi %0, %5 : i32
    %7 = arith.index_cast %6 : i32 to index
    %8 = memref.load %arg1[%7] : memref<16xi32, #tpu.memory_space<smem>>
    %9 = arith.index_cast %8 : i32 to index
    %c0 = arith.constant 0 : index
    %10 = vector.load %arg2[%9, %c0] : memref<64x128xf32, #tpu.memory_space<vmem>>, vector<1x128xf32>
    %11 = arith.index_cast %5 : i32 to index
    %c0_3 = arith.constant 0 : index
    %12 = vector.load %arg6[%11, %c0_3] : memref<8x128xf32, #tpu.memory_space<vmem>>, vector<1x128xf32>
    tpu.vector_store %arg6[%11, %c0_3], %10 {strides = array<i32>} : memref<8x128xf32, #tpu.memory_space<vmem>>, vector<1x128xf32>,
    %c1_i32_4 = arith.constant 1 : i32
    %13 = arith.addi %4, %c1_i32_4 : i32
    %14 = arith.addi %0, %13 : i32
    %15 = arith.index_cast %14 : i32 to index
    %16 = memref.load %arg1[%15] : memref<16xi32, #tpu.memory_space<smem>>
    %17 = arith.index_cast %16 : i32 to index
    %c0_5 = arith.constant 0 : index
    %18 = vector.load %arg2[%17, %c0_5] : memref<64x128xf32, #tpu.memory_space<vmem>>, vector<1x128xf32>
    %19 = arith.index_cast %13 : i32 to index
    %c0_6 = arith.constant 0 : index
    %20 = vector.load %arg6[%19, %c0_6] : memref<8x128xf32, #tpu.memory_space<vmem>>, vector<1x128xf32>
    tpu.vector_store %arg6[%19, %c0_6], %18 {strides = array<i32>} : memref<8x128xf32, #tpu.memory_space<vmem>>, vector<1x128xf32>,
    %c2_i32 = arith.constant 2 : i32
    %21 = arith.addi %4, %c2_i32 : i32
    %22 = arith.addi %0, %21 : i32
    %23 = arith.index_cast %22 : i32 to index
    %24 = memref.load %arg1[%23] : memref<16xi32, #tpu.memory_space<smem>>
    %25 = arith.index_cast %24 : i32 to index
    %c0_7 = arith.constant 0 : index
    %26 = vector.load %arg2[%25, %c0_7] : memref<64x128xf32, #tpu.memory_space<vmem>>, vector<1x128xf32>
    %27 = arith.index_cast %21 : i32 to index
    %c0_8 = arith.constant 0 : index
    %28 = vector.load %arg6[%27, %c0_8] : memref<8x128xf32, #tpu.memory_space<vmem>>, vector<1x128xf32>
    tpu.vector_store %arg6[%27, %c0_8], %26 {strides = array<i32>} : memref<8x128xf32, #tpu.memory_space<vmem>>, vector<1x128xf32>,
    %c3_i32 = arith.constant 3 : i32
    %29 = arith.addi %4, %c3_i32 : i32
    %30 = arith.addi %0, %29 : i32
    %31 = arith.index_cast %30 : i32 to index
    %32 = memref.load %arg1[%31] : memref<16xi32, #tpu.memory_space<smem>>
    %33 = arith.index_cast %32 : i32 to index
    %c0_9 = arith.constant 0 : index
    %34 = vector.load %arg2[%33, %c0_9] : memref<64x128xf32, #tpu.memory_space<vmem>>, vector<1x128xf32>
    %35 = arith.index_cast %29 : i32 to index
    %c0_10 = arith.constant 0 : index
    %36 = vector.load %arg6[%35, %c0_10] : memref<8x128xf32, #tpu.memory_space<vmem>>, vector<1x128xf32>
    tpu.vector_store %arg6[%35, %c0_10], %34 {strides = array<i32>} : memref<8x128xf32, #tpu.memory_space<vmem>>, vector<1x128xf32>,
    %c4_i32 = arith.constant 4 : i32
    %37 = arith.addi %4, %c4_i32 : i32
    %38 = arith.addi %0, %37 : i32
    %39 = arith.index_cast %38 : i32 to index
    %40 = memref.load %arg1[%39] : memref<16xi32, #tpu.memory_space<smem>>
    %41 = arith.index_cast %40 : i32 to index
    %c0_11 = arith.constant 0 : index
    %42 = vector.load %arg2[%41, %c0_11] : memref<64x128xf32, #tpu.memory_space<vmem>>, vector<1x128xf32>
    %43 = arith.index_cast %37 : i32 to index
    %c0_12 = arith.constant 0 : index
    %44 = vector.load %arg6[%43, %c0_12] : memref<8x128xf32, #tpu.memory_space<vmem>>, vector<1x128xf32>
    tpu.vector_store %arg6[%43, %c0_12], %42 {strides = array<i32>} : memref<8x128xf32, #tpu.memory_space<vmem>>, vector<1x128xf32>,
    %c5_i32 = arith.constant 5 : i32
    %45 = arith.addi %4, %c5_i32 : i32
    %46 = arith.addi %0, %45 : i32
    %47 = arith.index_cast %46 : i32 to index
    %48 = memref.load %arg1[%47] : memref<16xi32, #tpu.memory_space<smem>>
    %49 = arith.index_cast %48 : i32 to index
    %c0_13 = arith.constant 0 : index
    %50 = vector.load %arg2[%49, %c0_13] : memref<64x128xf32, #tpu.memory_space<vmem>>, vector<1x128xf32>
    %51 = arith.index_cast %45 : i32 to index
    %c0_14 = arith.constant 0 : index
    %52 = vector.load %arg6[%51, %c0_14] : memref<8x128xf32, #tpu.memory_space<vmem>>, vector<1x128xf32>
    tpu.vector_store %arg6[%51, %c0_14], %50 {strides = array<i32>} : memref<8x128xf32, #tpu.memory_space<vmem>>, vector<1x128xf32>,
    %c6_i32 = arith.constant 6 : i32
    %53 = arith.addi %4, %c6_i32 : i32
    %54 = arith.addi %0, %53 : i32
    %55 = arith.index_cast %54 : i32 to index
    %56 = memref.load %arg1[%55] : memref<16xi32, #tpu.memory_space<smem>>
    %57 = arith.index_cast %56 : i32 to index
    %c0_15 = arith.constant 0 : index
    %58 = vector.load %arg2[%57, %c0_15] : memref<64x128xf32, #tpu.memory_space<vmem>>, vector<1x128xf32>
    %59 = arith.index_cast %53 : i32 to index
    %c0_16 = arith.constant 0 : index
    %60 = vector.load %arg6[%59, %c0_16] : memref<8x128xf32, #tpu.memory_space<vmem>>, vector<1x128xf32>
    tpu.vector_store %arg6[%59, %c0_16], %58 {strides = array<i32>} : memref<8x128xf32, #tpu.memory_space<vmem>>, vector<1x128xf32>,
    %c7_i32 = arith.constant 7 : i32
    %61 = arith.addi %4, %c7_i32 : i32
    %62 = arith.addi %0, %61 : i32
    %63 = arith.index_cast %62 : i32 to index
    %64 = memref.load %arg1[%63] : memref<16xi32, #tpu.memory_space<smem>>
    %65 = arith.index_cast %64 : i32 to index
    %c0_17 = arith.constant 0 : index
    %66 = vector.load %arg2[%65, %c0_17] : memref<64x128xf32, #tpu.memory_space<vmem>>, vector<1x128xf32>
    %67 = arith.index_cast %61 : i32 to index
    %c0_18 = arith.constant 0 : index
    %68 = vector.load %arg6[%67, %c0_18] : memref<8x128xf32, #tpu.memory_space<vmem>>, vector<1x128xf32>
    tpu.vector_store %arg6[%67, %c0_18], %66 {strides = array<i32>} : memref<8x128xf32, #tpu.memory_space<vmem>>, vector<1x128xf32>,
    %c1_i32_19 = arith.constant 1 : i32
    %c0_20 = arith.constant 0 : index
    %c0_21 = arith.constant 0 : index
    %69 = vector.load %arg6[%c0_20, %c0_21] : memref<8x128xf32, #tpu.memory_space<vmem>>, vector<8x128xf32>
    %c0_22 = arith.constant 0 : index
    %c0_23 = arith.constant 0 : index
    %70 = vector.load %arg3[%c0_22, %c0_23] : memref<128x128xf32, #tpu.memory_space<vmem>>, vector<128x128xf32>
    %cst = arith.constant dense<0.000000e+00> : vector<8x128xf32>
    %71 = tpu.matmul %69, %70, %cst {dimension_numbers = #tpu.dot_dimension_numbers<[1], [0], [0], [1], [0, 0, 1, 1], [], []>} : vector<8x128xf32>, vector<128x128xf32>, vector<8x128xf32> -> vector<8x128xf32>
    %c0_24 = arith.constant 0 : index
    %c0_25 = arith.constant 0 : index
    %72 = vector.load %arg4[%c0_24, %c0_25] : memref<1x128xf32, #tpu.memory_space<vmem>>, vector<1x128xf32>
    %73 = vector.broadcast %72 : vector<1x128xf32> to vector<8x128xf32>
    %74 = arith.addf %71, %73 : vector<8x128xf32>
    %c0_26 = arith.constant 0 : index
    %c0_27 = arith.constant 0 : index
    %75 = vector.load %arg5[%c0_26, %c0_27] : memref<8x128xf32, #tpu.memory_space<vmem>>, vector<8x128xf32>
    tpu.vector_store %arg5[%c0_26, %c0_27], %74 {strides = array<i32>} : memref<8x128xf32, #tpu.memory_space<vmem>>, vector<8x128xf32>,
    return
  }
  func.func @transform_0(%arg0: i32, %arg1: memref<16xi32, #tpu.memory_space<smem>>) -> (i32, i32) {
    %c0_i32 = arith.constant 0 : i32
    %c0_i32_0 = arith.constant 0 : i32
    %c0_i32_1 = arith.constant 0 : i32
    return %c0_i32, %c0_i32_0 : i32, i32
  }
  func.func @transform_1(%arg0: i32, %arg1: memref<16xi32, #tpu.memory_space<smem>>) -> (i32, i32) {
    %c0_i32 = arith.constant 0 : i32
    %c0_i32_0 = arith.constant 0 : i32
    %c0_i32_1 = arith.constant 0 : i32
    return %c0_i32, %c0_i32_0 : i32, i32
  }
  func.func @transform_2(%arg0: i32, %arg1: memref<16xi32, #tpu.memory_space<smem>>) -> (i32, i32) {
    %c0_i32 = arith.constant 0 : i32
    %c0_i32_0 = arith.constant 0 : i32
    %c0_i32_1 = arith.constant 0 : i32
    return %c0_i32, %c0_i32_0 : i32, i32
  }
  func.func @transform_3(%arg0: i32, %arg1: memref<16xi32, #tpu.memory_space<smem>>) -> (i32, i32) {
    %c0_i32 = arith.constant 0 : i32
    %c0_i32_0 = arith.constant 0 : i32
    return %arg0, %c0_i32 : i32, i32
  }
}

</mosaic_0001>

<llo_original>
// kernel: token_embedding_forward.1
$region0: #{token_embedding_forward.1}
  #allocation0 [shape = 'u32[]', space=smem, size = 0x4, offset = 0x4, fixed_abs, tag = 'smem constant byte address 0x4 - core index']
  #allocation1 [shape = 'u32[144,128]{1,0:T(1,128)}', space=vmem, size = 0x12000, scoped, tag = 'internal scratch']
  #allocation2 [shape = 'f32[8,128]{1,0:T(8,128)}', space=vmem, size = 0x1000, scoped, tag = 'scratch operand']
  #allocation3 [shape = 's32[1]{0}', space=sflag, size = 0x4, scoped, tag = 'scoped memory for token_embedding_forward.1']
  #allocation4 [shape = 'u8[512]{0}', space=smem, size = 0x200, scoped, tag = 'prefetched SMEM operand 0']
  %s0 = inlined_call_operand.vmem [shape: s32[16], index: 0, kind: input, shape index: {}]
  %s1 = inlined_call_operand.vmem [shape: f32[64,128], index: 1, kind: input, shape index: {}]
  %s2 = inlined_call_operand.vmem [shape: f32[128,128], index: 2, kind: input, shape index: {}]
  %s3 = inlined_call_operand.vmem [shape: f32[1,128], index: 3, kind: input, shape index: {}]
  %s4 = inlined_call_operand.vmem [shape: f32[16,128], index: 4, kind: output, shape index: {}]
  %s5 = sld [smem:[#allocation0]]
  $region45: #{token_embedding_forward.1} parent=0
    _
  %s7 = ssub.s32 1, %s5
  %s8 = scalar_select 0, %s7, %s5
  %s9 = sshll.u32 %s0, 4
  %s10 = int_to_ptr.vmem [resolvable:$true] %s9
  %12 = dma.vmem_to_smem %s10, 16, [#allocation4], [#allocation3]
  %13 = dma.done [#allocation3], 16
  %14 = sfence
  loop: start=0, step=1, limit=4
  $region2: #{token_embedding_forward.1} parent=0 // loop_pre_header
    _
  $region3: #{token_embedding_forward.1} parent=0 // loop_header
    %s16 = sphi 0, %s20
    %p17 = scmp.ge.s32.totalorder %s16, 4
    %s24 = sphi 0, %s24
    %s26 = sphi 0, %s24
    %s27 = sphi 0, %s26
    %s41 = sphi 0, %s27
    %s45 = sphi 0, %s45
    %s47 = sphi 0, %s45
    %s48 = sphi 0, %s47
    %s62 = sphi 0, %s48
    %s66 = sphi 0, %s66
    %s68 = sphi 0, %s66
    %s69 = sphi 0, %s68
    %s83 = sphi 0, %s69
    %s89 = sphi 0, %s91
    %s92 = sphi 0, %s89
    %s93 = sphi 0, %s92
    %s109 = sphi 0, %s93
  $region4: #{token_embedding_forward.1} parent=0 // loop_header_branch
    %19 = sbr.rel (%p17) target = $region8
  $region5: #{token_embedding_forward.1} parent=0 // loop_body
    %s21 = ssub.s32 %s16, 1
    %s22 = ssub.s32 %s16, 2
    %s23 = sadd.s32 %s16, 1
    %s25 = sadd.s32 %s24, 1
    %p28 = scmp.eq.s32.totalorder %s16, 1
    %p29 = scmp.ne.s32.totalorder %s24, %s26
    %p30 = scmp.eq.s32.totalorder %s16, 0
    %p31 = por %p29, %p30
    %p32 = scmp.ne.s32.totalorder %s24, %s26
    %p33 = scmp.eq.s32.totalorder %s21, 1
    %p34 = por %p32, %p33
    %p35 = scmp.ne.s32.totalorder %s26, %s27
    %p36 = scmp.eq.s32.totalorder %s21, 0
    %p37 = por %p35, %p36
    %p38 = scmp.ne.s32.totalorder %s26, %s27
    %p39 = scmp.eq.s32.totalorder %s22, 1
    %p40 = por %p38, %p39
    %p42 = scmp.ne.s32.totalorder %s27, %s41
    %p43 = scmp.eq.s32.totalorder %s22, 0
    %p44 = por %p42, %p43
    %s46 = sadd.s32 %s45, 1
    %p49 = scmp.eq.s32.totalorder %s16, 1
    %p50 = scmp.ne.s32.totalorder %s45, %s47
    %p51 = scmp.eq.s32.totalorder %s16, 0
    %p52 = por %p50, %p51
    %p53 = scmp.ne.s32.totalorder %s45, %s47
    %p54 = scmp.eq.s32.totalorder %s21, 1
    %p55 = por %p53, %p54
    %p56 = scmp.ne.s32.totalorder %s47, %s48
    %p57 = scmp.eq.s32.totalorder %s21, 0
    %p58 = por %p56, %p57
    %p59 = scmp.ne.s32.totalorder %s47, %s48
    %p60 = scmp.eq.s32.totalorder %s22, 1
    %p61 = por %p59, %p60
    %p63 = scmp.ne.s32.totalorder %s48, %s62
    %p64 = scmp.eq.s32.totalorder %s22, 0
    %p65 = por %p63, %p64
    %s67 = sadd.s32 %s66, 1
    %p70 = scmp.eq.s32.totalorder %s16, 1
    %p71 = scmp.ne.s32.totalorder %s66, %s68
    %p72 = scmp.eq.s32.totalorder %s16, 0
    %p73 = por %p71, %p72
    %p74 = scmp.ne.s32.totalorder %s66, %s68
    %p75 = scmp.eq.s32.totalorder %s21, 1
    %p76 = por %p74, %p75
    %p77 = scmp.ne.s32.totalorder %s68, %s69
    %p78 = scmp.eq.s32.totalorder %s21, 0
    %p79 = por %p77, %p78
    %p80 = scmp.ne.s32.totalorder %s68, %s69
    %p81 = scmp.eq.s32.totalorder %s22, 1
    %p82 = por %p80, %p81
    %p84 = scmp.ne.s32.totalorder %s69, %s83
    %p85 = scmp.eq.s32.totalorder %s22, 0
    %p86 = por %p84, %p85
    %s87 = ssub.s32 %s16, %s23
    %p88 = scmp.eq.s32.totalorder %s87, 0
    %s90 = sadd.s32 %s89, 1
    %s91 = scalar_select %p88, %s89, %s90
    %p94 = pneg %p88
    %p95 = scmp.eq.s32.totalorder %s16, 1
    %p96 = por %p94, %p95
    %p97 = scmp.ne.s32.totalorder %s89, %s92
    %p98 = scmp.eq.s32.totalorder %s16, 0
    %p99 = por %p97, %p98
    %p100 = scmp.ne.s32.totalorder %s89, %s92
    %p101 = scmp.eq.s32.totalorder %s21, 1
    %p102 = por %p100, %p101
    %p103 = scmp.ne.s32.totalorder %s92, %s93
    %p104 = scmp.eq.s32.totalorder %s21, 0
    %p105 = por %p103, %p104
    %p106 = scmp.ne.s32.totalorder %s92, %s93
    %p107 = scmp.eq.s32.totalorder %s22, 1
    %p108 = por %p106, %p107
    %p110 = scmp.ne.s32.totalorder %s93, %s109
    %p111 = scmp.eq.s32.totalorder %s22, 0
    %p112 = por %p110, %p111
    %p113 = scmp.le.s32.totalorder 1, %s16
    %p114 = scmp.lt.s32.totalorder %s16, 3
    %p115 = pnand %p113, %p114
    %p116 = pneg %p115
    // Predicated region
    $region9: #{token_embedding_forward.1} parent=5 // pred_check
      _
    $region10: #{token_embedding_forward.1} parent=5 // pred_check_branch
      %118 = sbr.rel (%p115) target = $region12
    $region11: #{token_embedding_forward.1} parent=5 // pred_region
      %s119 = ssub.s32 %s16, 1
      // Predicated region
      $region13: #{token_embedding_forward.1} parent=11 // pred_check
        %p120 = pneg %p37
      $region14: #{token_embedding_forward.1} parent=11 // pred_check_branch
        %122 = sbr.rel (%p120) target = $region16
      $region15: #{token_embedding_forward.1} parent=11 // pred_region
        _
      $region16: #{token_embedding_forward.1} parent=11 // pred_fallthru
        _
      // Predicated region
      $region17: #{token_embedding_forward.1} parent=11 // pred_check
        %p123 = pneg %p58
      $region18: #{token_embedding_forward.1} parent=11 // pred_check_branch
        %125 = sbr.rel (%p123) target = $region20
      $region19: #{token_embedding_forward.1} parent=11 // pred_region
        _
      $region20: #{token_embedding_forward.1} parent=11 // pred_fallthru
        _
      // Predicated region
      $region21: #{token_embedding_forward.1} parent=11 // pred_check
        %p126 = pneg %p79
      $region22: #{token_embedding_forward.1} parent=11 // pred_check_branch
        %128 = sbr.rel (%p126) target = $region24
      $region23: #{token_embedding_forward.1} parent=11 // pred_region
        _
      $region24: #{token_embedding_forward.1} parent=11 // pred_fallthru
        _
    $region12: #{token_embedding_forward.1} parent=5 // pred_fallthru
      _
    %p129 = scmp.lt.s32.totalorder %s16, 2
    // Predicated region
    $region25: #{token_embedding_forward.1} parent=5 // pred_check
      %p130 = pneg %p129
    $region26: #{token_embedding_forward.1} parent=5 // pred_check_branch
      %132 = sbr.rel (%p130) target = $region28
    $region27: #{token_embedding_forward.1} parent=5 // pred_region
      _
    $region28: #{token_embedding_forward.1} parent=5 // pred_fallthru
      _
    %p133 = scmp.le.s32.totalorder 1, %s16
    %p134 = scmp.lt.s32.totalorder %s16, 3
    %p135 = pnand %p133, %p134
    %p136 = pneg %p135
    // Predicated region
    $region29: #{token_embedding_forward.1} parent=5 // pred_check
      _
    $region30: #{token_embedding_forward.1} parent=5 // pred_check_branch
      %138 = sbr.rel (%p135) target = $region32
    $region31: #{token_embedding_forward.1} parent=5 // pred_region
      %s139 = ssub.s32 %s16, 1
      %p140 = pneg %p37
      %p141 = pneg %p34
      %p142 = pneg %p58
      %p143 = pneg %p55
      %p144 = pneg %p79
      %p145 = pneg %p76
      %p146 = pneg %p105
      %p147 = pneg %p102
      %p148 = scmp.lt.s32.totalorder %s21, 1
      %s149 = scalar_select %p148, %s21, 1
      %s150 = smul.addr %s149, 8
      %s151 = scalar_lea.vmem %s4, %s150
      %p152 = scmp.lt.s32.totalorder %s21, 1
      %s153 = scalar_select %p152, %s21, 1
      %s154 = smul.addr %s153, 8
      %s155 = scalar_lea.vmem %s4, %s154
      %s156 = smul.u32 %s21, 8
      %s157 = sadd.s32 %s156, 0
      %s158 = sld [smem:[#allocation4 + %s157]]
      %s159 = scalar_lea.vmem %s1, %s158
      %v160 = vld [vmem:[%s159] sm:$0x1]
      %161 = vst [vmem:[#allocation2] sm:$0x1] %v160
      %s162 = sadd.s32 0, 1
      %s163 = sadd.s32 %s156, %s162
      %s164 = sld [smem:[#allocation4 + %s163]]
      %s165 = scalar_lea.vmem %s1, %s164
      %v166 = vld [vmem:[%s165] sm:$0x1]
      %s167 = scalar_lea.vmem [#allocation2], %s162
      %168 = vst [vmem:[%s167] sm:$0x1] %v166
      %s169 = sadd.s32 0, 2
      %s170 = sadd.s32 %s156, %s169
      %s171 = sld [smem:[#allocation4 + %s170]]
      %s172 = scalar_lea.vmem %s1, %s171
      %v173 = vld [vmem:[%s172] sm:$0x1]
      %s174 = scalar_lea.vmem [#allocation2], %s169
      %175 = vst [vmem:[%s174] sm:$0x1] %v173
      %s176 = sadd.s32 0, 3
      %s177 = sadd.s32 %s156, %s176
      %s178 = sld [smem:[#allocation4 + %s177]]
      %s179 = scalar_lea.vmem %s1, %s178
      %v180 = vld [vmem:[%s179] sm:$0x1]
      %s181 = scalar_lea.vmem [#allocation2], %s176
      %182 = vst [vmem:[%s181] sm:$0x1] %v180
      %s183 = sadd.s32 0, 4
      %s184 = sadd.s32 %s156, %s183
      %s185 = sld [smem:[#allocation4 + %s184]]
      %s186 = scalar_lea.vmem %s1, %s185
      %v187 = vld [vmem:[%s186] sm:$0x1]
      %s188 = scalar_lea.vmem [#allocation2], %s183
      %189 = vst [vmem:[%s188] sm:$0x1] %v187
      %s190 = sadd.s32 0, 5
      %s191 = sadd.s32 %s156, %s190
      %s192 = sld [smem:[#allocation4 + %s191]]
      %s193 = scalar_lea.vmem %s1, %s192
      %v194 = vld [vmem:[%s193] sm:$0x1]
      %s195 = scalar_lea.vmem [#allocation2], %s190
      %196 = vst [vmem:[%s195] sm:$0x1] %v194
      %s197 = sadd.s32 0, 6
      %s198 = sadd.s32 %s156, %s197
      %s199 = sld [smem:[#allocation4 + %s198]]
      %s200 = scalar_lea.vmem %s1, %s199
      %v201 = vld [vmem:[%s200] sm:$0x1]
      %s202 = scalar_lea.vmem [#allocation2], %s197
      %203 = vst [vmem:[%s202] sm:$0x1] %v201
      %s204 = sadd.s32 0, 7
      %s205 = sadd.s32 %s156, %s204
      %s206 = sld [smem:[#allocation4 + %s205]]
      %s207 = scalar_lea.vmem %s1, %s206
      %v208 = vld [vmem:[%s207] sm:$0x1]
      %s209 = scalar_lea.vmem [#allocation2], %s204
      %210 = vst [vmem:[%s209] sm:$0x1] %v208
      %v211 = vld [vmem:[#allocation2] sm:$0xff]
      %v212 = vld [vmem:[%s2] sm:$0xff]
      %v213 = vld [vmem:[%s2 + $0x8] sm:$0xff]
      %v214 = vld [vmem:[%s2 + $0x10] sm:$0xff]
      %v215 = vld [vmem:[%s2 + $0x18] sm:$0xff]
      %v216 = vld [vmem:[%s2 + $0x20] sm:$0xff]
      %v217 = vld [vmem:[%s2 + $0x28] sm:$0xff]
      %v218 = vld [vmem:[%s2 + $0x30] sm:$0xff]
      %v219 = vld [vmem:[%s2 + $0x38] sm:$0xff]
      %v220 = vld [vmem:[%s2 + $0x40] sm:$0xff]
      %v221 = vld [vmem:[%s2 + $0x48] sm:$0xff]
      %v222 = vld [vmem:[%s2 + $0x50] sm:$0xff]
      %v223 = vld [vmem:[%s2 + $0x58] sm:$0xff]
      %v224 = vld [vmem:[%s2 + $0x60] sm:$0xff]
      %v225 = vld [vmem:[%s2 + $0x68] sm:$0xff]
      %v226 = vld [vmem:[%s2 + $0x70] sm:$0xff]
      %v227 = vld [vmem:[%s2 + $0x78] sm:$0xff]
      %v228 = vld [vmem:[%s3] sm:$0x1]
      %v230 = vlaneseq
      %v231 = vshrl.u32 %v230, 7
      %v232 = vsub.s32 0, %v231
      %v233 = vrot.slane %v228, %v232
      %235 = vmatprep.subr.mxu0 0.0
      %236 = vmatpush1.msra.mxu0 %v212
      %237 = vmatprep.subr.mxu0 0.0
      %238 = vmatpush1.msra.mxu0 %v213
      %239 = vmatprep.subr.mxu0 0.0
      %240 = vmatpush1.msra.mxu0 %v214
      %241 = vmatprep.subr.mxu0 0.0
      %242 = vmatpush1.msra.mxu0 %v215
      %243 = vmatprep.subr.mxu0 0.0
      %244 = vmatpush1.msra.mxu0 %v216
      %245 = vmatprep.subr.mxu0 0.0
      %246 = vmatpush1.msra.mxu0 %v217
      %247 = vmatprep.subr.mxu0 0.0
      %248 = vmatpush1.msra.mxu0 %v218
      %249 = vmatprep.subr.mxu0 0.0
      %250 = vmatpush1.msra.mxu0 %v219
      %251 = vmatprep.subr.mxu0 0.0
      %252 = vmatpush1.msra.mxu0 %v220
      %253 = vmatprep.subr.mxu0 0.0
      %254 = vmatpush1.msra.mxu0 %v221
      %255 = vmatprep.subr.mxu0 0.0
      %256 = vmatpush1.msra.mxu0 %v222
      %257 = vmatprep.subr.mxu0 0.0
      %258 = vmatpush1.msra.mxu0 %v223
      %259 = vmatprep.subr.mxu0 0.0
      %260 = vmatpush1.msra.mxu0 %v224
      %261 = vmatprep.subr.mxu0 0.0
      %262 = vmatpush1.msra.mxu0 %v225
      %263 = vmatprep.subr.mxu0 0.0
      %264 = vmatpush1.msra.mxu0 %v226
      %265 = vmatprep.subr.mxu0 0.0
      %266 = vmatpush1.msra.mxu0 %v227
      %267 = vmatprep.subr.mxu0 0.0
      %268 = vmatpush1.msra.mxu0 0.0
      %269 = vmatprep.subr.mxu0 0.0
      %270 = vmatpush1.msra.mxu0 0.0
      %271 = vmatprep.subr.mxu0 0.0
      %272 = vmatpush1.msra.mxu0 0.0
      %273 = vmatprep.subr.mxu0 0.0
      %274 = vmatpush1.msra.mxu0 0.0
      %275 = vmatprep.subr.mxu0 0.0
      %276 = vmatpush1.msra.mxu0 0.0
      %277 = vmatprep.subr.mxu0 0.0
      %278 = vmatpush1.msra.mxu0 0.0
      %279 = vmatprep.subr.mxu0 0.0
      %280 = vmatpush1.msra.mxu0 0.0
      %281 = vmatprep.subr.mxu0 0.0
      %282 = vmatpush1.msra.mxu0 0.0
      %283 = vmatprep.subr.mxu0 0.0
      %284 = vmatpush1.msra.mxu0 0.0
      %285 = vmatprep.subr.mxu0 0.0
      %286 = vmatpush1.msra.mxu0 0.0
      %287 = vmatprep.subr.mxu0 0.0
      %288 = vmatpush1.msra.mxu0 0.0
      %289 = vmatprep.subr.mxu0 0.0
      %290 = vmatpush1.msra.mxu0 0.0
      %291 = vmatprep.subr.mxu0 0.0
      %292 = vmatpush1.msra.mxu0 0.0
      %293 = vmatprep.subr.mxu0 0.0
      %294 = vmatpush1.msra.mxu0 0.0
      %295 = vmatprep.subr.mxu0 0.0
      %296 = vmatpush1.msra.mxu0 0.0
      %297 = vmatprep.subr.mxu0 0.0
      %298 = vmatpush1.msra.mxu0 0.0
      %299 = vmatprep.mubr.f32.mxu0 0.0
      %300 = vmatmul.mubr.f32.gmra.mrb[0].mxu0 %v211
      %v301 = vpop.f32.mrb[0].mxu0
      %v302 = vadd.f32 %v233, %v301
      %v303 = vpop.f32.mrb[0].mxu0
      %304 = vdwg.mxu0
      %305 = vst [vmem:[%s155] sm:$0xff] %v302
      %p306 = scmp.lt.s32.totalorder %s21, 1
      %s307 = scalar_select %p306, %s21, 1
      %s308 = smul.addr %s307, 8
      %s309 = scalar_lea.vmem %s4, %s308
      // Predicated region
      $region33: #{token_embedding_forward.1} parent=31 // pred_check
        %p310 = pneg %p102
      $region34: #{token_embedding_forward.1} parent=31 // pred_check_branch
        %312 = sbr.rel (%p310) target = $region36
      $region35: #{token_embedding_forward.1} parent=31 // pred_region
        _
      $region36: #{token_embedding_forward.1} parent=31 // pred_fallthru
        _
    $region32: #{token_embedding_forward.1} parent=5 // pred_fallthru
      _
    %p313 = scmp.le.s32.totalorder 2, %s16
    // Predicated region
    $region37: #{token_embedding_forward.1} parent=5 // pred_check
      %p314 = pneg %p313
    $region38: #{token_embedding_forward.1} parent=5 // pred_check_branch
      %316 = sbr.rel (%p314) target = $region40
    $region39: #{token_embedding_forward.1} parent=5 // pred_region
      %s317 = ssub.s32 %s16, 2
      // Predicated region
      $region41: #{token_embedding_forward.1} parent=39 // pred_check
        %p318 = pneg %p108
      $region42: #{token_embedding_forward.1} parent=39 // pred_check_branch
        %320 = sbr.rel (%p318) target = $region44
      $region43: #{token_embedding_forward.1} parent=39 // pred_region
        %p321 = scmp.lt.s32.totalorder %s22, 1
        %s322 = scalar_select %p321, %s22, 1
        %s323 = smul.addr %s322, 8
        %s324 = scalar_lea.vmem %s4, %s323
      $region44: #{token_embedding_forward.1} parent=39 // pred_fallthru
        _
    $region40: #{token_embedding_forward.1} parent=5 // pred_fallthru
      _
  $region6: #{token_embedding_forward.1} parent=0 // loop_footer
    %s20 = sadd.s32 1, %s16
  $region7: #{token_embedding_forward.1} parent=0 // loop_footer_branch
    %15 = sbr.rel target = $region3
  $region8: #{token_embedding_forward.1} parent=0 // loop_exit
    _

</llo_original>
